<compile_context>
chip_gen: v6e
topology: v6e:2x2x1
jax: 0.10.0
libtpu: 0.0.40
codegen_flags: <defaults>
</compile_context>

<pallas_src>
import functools

import jax
import jax.numpy as jnp
from jax import lax
from jax.experimental import pallas as pl
from jax.experimental.pallas import tpu as pltpu


def _round_up(x: int, m: int) -> int:
    return (x + m - 1) // m * m


def _round_down(x: int, m: int) -> int:
    return x // m * m


# ----------------------------------------------------------------------------
# Pallas kernel: per-B-tile partial sum of (||grad_b||_2 - 1)^2
# ----------------------------------------------------------------------------
def _gp_kernel(grad_ref, out_ref, acc_ref, *, true_b, true_f, tile_b, tile_f):
    # program_id must be read at kernel top level (NOT inside pl.when bodies).
    bi = pl.program_id(0)
    fi = pl.program_id(1)
    nf = pl.num_programs(1)

    @pl.when(fi == 0)
    def _init():
        acc_ref[...] = jnp.zeros(acc_ref.shape, acc_ref.dtype)

    g = grad_ref[...].astype(jnp.float32)                      # (TILE_B, TILE_F)

    # Mask feature-tail lanes of the (possibly partial) last F tile.  Masking
    # before the square also neutralizes any NaN/garbage in padded regions.
    col = fi * tile_f + lax.broadcasted_iota(jnp.int32, (1, tile_f), 1)
    g = jnp.where(col < true_f, g, 0.0)

    gg = g * g
    # Per-lane partial sums (VPU adds); the cross-lane reduce is deferred to the
    # finalize step so the steady-state loop stays hidden under the DMA.
    acc_ref[...] += jnp.sum(gg.reshape(tile_b, tile_f // 128, 128), axis=1)

    @pl.when(fi == nf - 1)
    def _finalize():
        ssq = jnp.sum(acc_ref[...], axis=1, keepdims=True)     # (TILE_B, 1)
        norm = jnp.sqrt(ssq)
        pen = (norm - 1.0) ** 2
        # Mask batch-padding rows so the mean uses the true batch size.
        row = bi * tile_b + lax.broadcasted_iota(jnp.int32, (tile_b, 1), 0)
        pen = jnp.where(row < true_b, pen, 0.0)
        # Lane/sublane-dense output block -> unmasked store.
        out_ref[...] = jnp.broadcast_to(jnp.sum(pen), (1, 8, 128))


_TARGET_BLOCK_BYTES = 8 * 1024 * 1024  # ~8 MiB block; double-buffered = 16 MiB.


def gradient_penalty_pallas(grad_flat: jax.Array, lambda_gp: float) -> jax.Array:
    """grad_flat: (B, F) in its native dtype. Returns scalar f32 loss."""
    B, F = grad_flat.shape
    itemsize = jnp.dtype(grad_flat.dtype).itemsize
    # Sublane packing: 8 rows/vreg for 4B dtypes, 16 for 2B, 32 for 1B.
    sub_pack = max(8, 32 // itemsize)

    # Batch (sublane) tile.
    if B <= sub_pack:
        TILE_B = B                                   # full dim -> legal block
    else:
        TILE_B = min(_round_up(B, sub_pack), 128)

    # Feature (lane) tile: size so that the *sublane-padded* block is ~8 MiB.
    budget_rows = max(TILE_B, sub_pack)
    lanes_budget = max(
        128, _round_down(_TARGET_BLOCK_BYTES // (budget_rows * itemsize), 128))
    TILE_F = min(_round_up(F, 128), lanes_budget)    # always a 128-multiple

    nb = pl.cdiv(B, TILE_B)
    nf = pl.cdiv(F, TILE_F)

    kernel = functools.partial(
        _gp_kernel, true_b=B, true_f=F, tile_b=TILE_B, tile_f=TILE_F)

    cost = pl.CostEstimate(
        flops=2 * B * F + 4 * B,
        transcendentals=B,
        bytes_accessed=B * F * itemsize + nb * 8 * 128 * 4,
    )

    partial = pl.pallas_call(
        kernel,
        out_shape=jax.ShapeDtypeStruct((nb, 8, 128), jnp.float32),
        grid_spec=pltpu.PrefetchScalarGridSpec(
            num_scalar_prefetch=0,
            grid=(nb, nf),                           # reduction axis (F) last
            in_specs=[pl.BlockSpec((TILE_B, TILE_F), lambda bi, fi: (bi, fi))],
            out_specs=pl.BlockSpec((1, 8, 128), lambda bi, fi: (bi, 0, 0)),
            scratch_shapes=[pltpu.VMEM((TILE_B, 128), jnp.float32)],
        ),
        compiler_params=pltpu.CompilerParams(
            dimension_semantics=("parallel", "arbitrary"),
            vmem_limit_bytes=32 * 1024 * 1024,
        ),
        cost_estimate=cost,
    )(grad_flat)

    # Tiny cross-tile combine (nb scalars), exact mean over the true batch size.
    return (lambda_gp / B) * jnp.sum(partial[:, 0, 0])


# ----------------------------------------------------------------------------
# Synthetic deterministic "discriminator" (stands in for the network whose
# output out[0] the PyTorch module differentiates through).  NHWC on purpose:
# the conv + its backward is the dominant cost and NHWC avoids TPU layout
# transposes.  The penalty itself is permutation-invariant over features.
# ----------------------------------------------------------------------------
def make_discriminator(in_ch: int, hidden: int = 8):
    kw = jnp.arange(3 * 3 * in_ch * hidden, dtype=jnp.float32)
    w = (jnp.sin(kw * 0.37) * 0.1).reshape(3, 3, in_ch, hidden)   # HWIO
    b = jnp.cos(jnp.arange(hidden, dtype=jnp.float32)) * 0.05

    def d_fn(x):  # x: (B, H, W, C)  NHWC
        y = lax.conv_general_dilated(
            x, w, window_strides=(1, 1), padding="SAME",
            dimension_numbers=("NHWC", "HWIO", "NHWC"))
        y = jnp.tanh(y + b)
        score = jnp.mean(y, axis=(1, 2, 3))      # (B,) per-sample scalar
        return (score,)                          # tuple, like the `out` list

    return d_fn


# ----------------------------------------------------------------------------
# CriterionAdditionalGP.forward
# ----------------------------------------------------------------------------
def criterion_additional_gp(d_fn, interpolated: jax.Array, lambda_gp: float) -> jax.Array:
    # torch.autograd.grad(out[0], interpolated, grad_outputs=ones)
    #   == grad of sum(out[0]) w.r.t. interpolated
    def sum_out0(x):
        return jnp.sum(d_fn(x)[0])

    grad = jax.grad(sum_out0)(interpolated)                 # (B, H, W, C)
    grad_flat = grad.reshape(grad.shape[0], -1)             # native dtype, no extra copy
    return gradient_penalty_pallas(grad_flat, lambda_gp)


if __name__ == "__main__":
    key = jax.random.PRNGKey(0)
    B, H, W, C = 2, 16, 16, 4                 # F = H*W*C = 1024
    lambda_gp = 10.0

    interpolated = jax.random.normal(key, (B, H, W, C), dtype=jnp.float32)
    d_fn = make_discriminator(C)

    loss_fn = jax.jit(lambda x: criterion_additional_gp(d_fn, x, lambda_gp))
    loss = loss_fn(interpolated)
    jax.block_until_ready(loss)

    # Pure-JAX reference check.
    g = jax.grad(lambda x: jnp.sum(d_fn(x)[0]))(interpolated).reshape(B, -1)
    g = g.astype(jnp.float32)
    ref = lambda_gp * jnp.mean((jnp.sqrt(jnp.sum(g ** 2, axis=1)) - 1.0) ** 2)
    assert jnp.allclose(loss, ref, rtol=1e-5, atol=1e-5), (loss, ref)

    print("KERNEL_OK")
</pallas_src>

<mosaic_0001>
module attributes {stable_mosaic.version = 11 : i64} {
  func.func @_gp_kernel(%arg0: i32, %arg1: i32, %arg2: memref<2x1024xf32, #tpu.memory_space<vmem>>, %arg3: memref<1x8x128xf32, #tpu.memory_space<vmem>>, %arg4: memref<2x128xf32, #tpu.memory_space<vmem>>) attributes {dimension_semantics = [#tpu.dimension_semantics<parallel>, #tpu.dimension_semantics<arbitrary>], iteration_bounds = array<i64: 1, 1>, scalar_prefetch = 0 : i64, scratch_operands = 1 : i64, tpu.core_type = #tpu.core_type<tc>, window_params = [{transform_indices = @transform_0, window_bounds = array<i64: 2, 1024>}, {transform_indices = @transform_1, window_bounds = array<i64: 1, 8, 128>}]} {
    %c0_i32 = arith.constant 0 : i32
    %0 = arith.cmpi eq, %arg1, %c0_i32 : i32
    %1 = arith.extui %0 : i1 to i32
    %c0_i32_0 = arith.constant 0 : i32
    %2 = arith.cmpi ne, %1, %c0_i32_0 : i32
    scf.if %2 {
      %cst_10 = arith.constant 0.000000e+00 : f32
      %23 = vector.broadcast %cst_10 : f32 to vector<2x128xf32>
      %c0_11 = arith.constant 0 : index
      %c0_12 = arith.constant 0 : index
      %24 = vector.load %arg4[%c0_11, %c0_12] : memref<2x128xf32, #tpu.memory_space<vmem>>, vector<2x128xf32>
      tpu.vector_store %arg4[%c0_11, %c0_12], %23 {strides = array<i32>} : memref<2x128xf32, #tpu.memory_space<vmem>>, vector<2x128xf32>,
    } else {
    }
    %c0 = arith.constant 0 : index
    %c0_1 = arith.constant 0 : index
    %3 = vector.load %arg2[%c0, %c0_1] : memref<2x1024xf32, #tpu.memory_space<vmem>>, vector<2x1024xf32>
    %c1024_i32 = arith.constant 1024 : i32
    %4 = arith.muli %arg1, %c1024_i32 : i32
    %5 = tpu.iota {dimensions = array<i32: 1>} : vector<1x1024xi32>
    %6 = vector.broadcast %4 : i32 to vector<1x1024xi32>
    %7 = arith.addi %6, %5 : vector<1x1024xi32>
    %c1024_i32_2 = arith.constant 1024 : i32
    %8 = vector.broadcast %c1024_i32_2 : i32 to vector<1x1024xi32>
    %9 = arith.cmpi slt, %7, %8 : vector<1x1024xi32>
    %cst = arith.constant 0.000000e+00 : f32
    %10 = vector.shape_cast %9 : vector<1x1024xi1> to vector<1x1024xi1>
    %11 = vector.broadcast %10 : vector<1x1024xi1> to vector<2x1024xi1>
    %12 = vector.broadcast %cst : f32 to vector<2x1024xf32>
    %13 = arith.select %11, %3, %12 : vector<2x1024xi1>, vector<2x1024xf32>
    %14 = arith.mulf %13, %13 : vector<2x1024xf32>
    %c0_3 = arith.constant 0 : index
    %c0_4 = arith.constant 0 : index
    %15 = vector.load %arg4[%c0_3, %c0_4] : memref<2x128xf32, #tpu.memory_space<vmem>>, vector<2x128xf32>
    %16 = vector.shape_cast %14 : vector<2x1024xf32> to vector<2x8x128xf32>
    %cst_5 = arith.constant dense<0.000000e+00> : vector<2x128xf32>
    %17 = vector.multi_reduction <add>, %16, %cst_5 [1] : vector<2x8x128xf32> to vector<2x128xf32>
    %18 = arith.addf %15, %17 : vector<2x128xf32>
    %c0_6 = arith.constant 0 : index
    %c0_7 = arith.constant 0 : index
    %19 = vector.load %arg4[%c0_6, %c0_7] : memref<2x128xf32, #tpu.memory_space<vmem>>, vector<2x128xf32>
    tpu.vector_store %arg4[%c0_6, %c0_7], %18 {strides = array<i32>} : memref<2x128xf32, #tpu.memory_space<vmem>>, vector<2x128xf32>,
    %c0_i32_8 = arith.constant 0 : i32
    %20 = arith.cmpi eq, %arg1, %c0_i32_8 : i32
    %21 = arith.extui %20 : i1 to i32
    %c0_i32_9 = arith.constant 0 : i32
    %22 = arith.cmpi ne, %21, %c0_i32_9 : i32
    scf.if %22 {
      %c0_10 = arith.constant 0 : index
      %c0_11 = arith.constant 0 : index
      %23 = vector.load %arg4[%c0_10, %c0_11] : memref<2x128xf32, #tpu.memory_space<vmem>>, vector<2x128xf32>
      %cst_12 = arith.constant dense<0.000000e+00> : vector<2xf32>
      %24 = vector.multi_reduction <add>, %23, %cst_12 [1] : vector<2x128xf32> to vector<2xf32>
      %25 = vector.shape_cast %24 : vector<2xf32> to vector<2x1xf32>
      %26 = math.sqrt %25 : vector<2x1xf32>
      %cst_13 = arith.constant 1.000000e+00 : f32
      %27 = vector.broadcast %cst_13 : f32 to vector<2x1xf32>
      %28 = arith.subf %26, %27 : vector<2x1xf32>
      %29 = arith.mulf %28, %28 : vector<2x1xf32>
      %c2_i32 = arith.constant 2 : i32
      %30 = arith.muli %arg0, %c2_i32 : i32
      %31 = tpu.iota {dimensions = array<i32: 0>} : vector<2x1xi32>
      %32 = vector.broadcast %30 : i32 to vector<2x1xi32>
      %33 = arith.addi %32, %31 : vector<2x1xi32>
      %c2_i32_14 = arith.constant 2 : i32
      %34 = vector.broadcast %c2_i32_14 : i32 to vector<2x1xi32>
      %35 = arith.cmpi slt, %33, %34 : vector<2x1xi32>
      %cst_15 = arith.constant 0.000000e+00 : f32
      %36 = vector.broadcast %cst_15 : f32 to vector<2x1xf32>
      %37 = arith.select %35, %29, %36 : vector<2x1xi1>, vector<2x1xf32>
      %38 = vector.shape_cast %37 : vector<2x1xf32> to vector<1x2x1xf32>
      %cst_16 = arith.constant dense<0.000000e+00> : vector<1xf32>
      %39 = vector.multi_reduction <add>, %38, %cst_16 [1, 2] : vector<1x2x1xf32> to vector<1xf32>
      %40 = vector.shape_cast %39 : vector<1xf32> to vector<1x1x1xf32>
      %41 = vector.extract %40[0, 0, 0] : f32 from vector<1x1x1xf32>
      %42 = vector.broadcast %41 : f32 to vector<1x8x128xf32>
      %c0_17 = arith.constant 0 : index
      %c0_18 = arith.constant 0 : index
      %c0_19 = arith.constant 0 : index
      %43 = vector.load %arg3[%c0_17, %c0_18, %c0_19] : memref<1x8x128xf32, #tpu.memory_space<vmem>>, vector<1x8x128xf32>
      tpu.vector_store %arg3[%c0_17, %c0_18, %c0_19], %42 {strides = array<i32>} : memref<1x8x128xf32, #tpu.memory_space<vmem>>, vector<1x8x128xf32>,
    } else {
    }
    return
  }
  func.func @transform_0(%arg0: i32, %arg1: i32) -> (i32, i32) {
    %c0_i32 = arith.constant 0 : i32
    return %arg0, %arg1 : i32, i32
  }
  func.func @transform_1(%arg0: i32, %arg1: i32) -> (i32, i32, i32) {
    %c0_i32 = arith.constant 0 : i32
    %c0_i32_0 = arith.constant 0 : i32
    %c0_i32_1 = arith.constant 0 : i32
    return %arg0, %c0_i32, %c0_i32_0 : i32, i32, i32
  }
}

</mosaic_0001>

<llo_original>
// kernel: _lambda_.1
$region0: #{_lambda_.1}
  #allocation0 [shape = 'u32[]', space=smem, size = 0x4, offset = 0x4, fixed_abs, tag = 'smem constant byte address 0x4 - core index']
  #allocation1 [shape = 'u32[144,128]{1,0:T(1,128)}', space=vmem, size = 0x12000, scoped, tag = 'internal scratch']
  #allocation2 [shape = 'f32[2,128]{1,0:T(2,128)}', space=vmem, size = 0x400, scoped, tag = 'scratch operand']
  %s0 = inlined_call_operand.vmem [shape: f32[2,1024], index: 0, kind: input, shape index: {}]
  %s1 = inlined_call_operand.vmem [shape: f32[1,8,128], index: 1, kind: output, shape index: {}]
  %s2 = sld [smem:[#allocation0]]
  $region22: #{_lambda_.1} parent=0
    _
  %s4 = ssub.s32 1, %s2
  %s5 = scalar_select 0, %s4, %s2
  // Predicated region
  $region2: #{_lambda_.1} parent=0 // pred_check
    _
  $region3: #{_lambda_.1} parent=0 // pred_check_branch
    %7 = sbr.rel (0) target = $region5
  $region4: #{_lambda_.1} parent=0 // pred_region
    _
  $region5: #{_lambda_.1} parent=0 // pred_fallthru
    _
  %p8 = scmp.eq.s32.totalorder 0, 0
  // Predicated region
  $region6: #{_lambda_.1} parent=0 // pred_check
    %p9 = pneg %p8
  $region7: #{_lambda_.1} parent=0 // pred_check_branch
    %11 = sbr.rel (%p9) target = $region9
  $region8: #{_lambda_.1} parent=0 // pred_region
    %12 = vst [vmem:[#allocation2] sm:$0x3] 0.0
  $region9: #{_lambda_.1} parent=0 // pred_fallthru
    _
  %v13 = vld [vmem:[%s0] sm:$0xff]
  %v14 = vld [vmem:[%s0 + $0x8] sm:$0xff]
  %s15 = smul.u32 0, 1024
  %v16 = vlaneseq
  %v17 = vand.u32 %v16, 127
  %v18 = vadd.s32 %v17, 128
  %v19 = vadd.s32 %v17, 256
  %v20 = vadd.s32 %v17, 384
  %v21 = vadd.s32 %v17, 512
  %v22 = vadd.s32 %v17, 640
  %v23 = vadd.s32 %v17, 768
  %v24 = vadd.s32 %v17, 896
  %v25 = vstv %s15
  %v26 = vadd.s32 %v25, %v17
  %v27 = vadd.s32 %v25, %v18
  %v28 = vadd.s32 %v25, %v19
  %v29 = vadd.s32 %v25, %v20
  %v30 = vadd.s32 %v25, %v21
  %v31 = vadd.s32 %v25, %v22
  %v32 = vadd.s32 %v25, %v23
  %v33 = vadd.s32 %v25, %v24
  %vm34 = vcmp.lt.s32.totalorder %v26, 1024
  %vm35 = vcmp.lt.s32.totalorder %v27, 1024
  %vm36 = vcmp.lt.s32.totalorder %v28, 1024
  %vm37 = vcmp.lt.s32.totalorder %v29, 1024
  %vm38 = vcmp.lt.s32.totalorder %v30, 1024
  %vm39 = vcmp.lt.s32.totalorder %v31, 1024
  %vm40 = vcmp.lt.s32.totalorder %v32, 1024
  %vm41 = vcmp.lt.s32.totalorder %v33, 1024
  %v42 = vsel %vm34, 1, 0
  %v43 = vsel %vm35, 1, 0
  %v44 = vsel %vm36, 1, 0
  %v45 = vsel %vm37, 1, 0
  %v46 = vsel %vm38, 1, 0
  %v47 = vsel %vm39, 1, 0
  %v48 = vsel %vm40, 1, 0
  %v49 = vsel %vm41, 1, 0
  %vm50 = vcmp.eq.s32.totalorder %v42, 1
  %vm51 = vcmp.eq.s32.totalorder %v43, 1
  %vm52 = vcmp.eq.s32.totalorder %v44, 1
  %vm53 = vcmp.eq.s32.totalorder %v45, 1
  %vm54 = vcmp.eq.s32.totalorder %v46, 1
  %vm55 = vcmp.eq.s32.totalorder %v47, 1
  %vm56 = vcmp.eq.s32.totalorder %v48, 1
  %vm57 = vcmp.eq.s32.totalorder %v49, 1
  %v60 = vcombine.high %v13, %v13
  %v62 = vunpack.c.l.s4 1983009808
  %v63 = vunpack.c.0.s8 %v62
  %v64 = vlaneseq
  %v65 = vshrl.u32 %v64, 7
  %v66 = vsub.s32 %v63, %v65
  %v67 = vrot.slane %v13, %v66
  %v69 = vunpack.c.l.s4 1983009808
  %v70 = vunpack.c.0.s8 %v69
  %v71 = vlaneseq
  %v72 = vshrl.u32 %v71, 7
  %v73 = vsub.s32 %v70, %v72
  %v74 = vrot.slane %v60, %v73
  %v75 = vcombine.high %v67, %v67
  %v76 = vcombine.high %v74, %v74
  %v77 = vcombine.high %v14, %v14
  %v79 = vunpack.c.l.s4 1983009808
  %v80 = vunpack.c.0.s8 %v79
  %v81 = vlaneseq
  %v82 = vshrl.u32 %v81, 7
  %v83 = vsub.s32 %v80, %v82
  %v84 = vrot.slane %v14, %v83
  %v86 = vunpack.c.l.s4 1983009808
  %v87 = vunpack.c.0.s8 %v86
  %v88 = vlaneseq
  %v89 = vshrl.u32 %v88, 7
  %v90 = vsub.s32 %v87, %v89
  %v91 = vrot.slane %v77, %v90
  %v92 = vcombine.high %v84, %v84
  %v93 = vcombine.high %v91, %v91
  %v102 = vsel %vm50, %v67, 0.0
  %v103 = vsel %vm51, %v75, 0.0
  %v104 = vsel %vm52, %v74, 0.0
  %v105 = vsel %vm53, %v76, 0.0
  %v106 = vsel %vm54, %v84, 0.0
  %v107 = vsel %vm55, %v92, 0.0
  %v108 = vsel %vm56, %v91, 0.0
  %v109 = vsel %vm57, %v93, 0.0
  %v110 = vmul.f32 %v102, %v102
  %v111 = vmul.f32 %v103, %v103
  %v112 = vmul.f32 %v104, %v104
  %v113 = vmul.f32 %v105, %v105
  %v114 = vmul.f32 %v106, %v106
  %v115 = vmul.f32 %v107, %v107
  %v116 = vmul.f32 %v108, %v108
  %v117 = vmul.f32 %v109, %v109
  %v118 = vld [vmem:[#allocation2] sm:$0x3]
  %v119 = vcombine.low %v110, %v112
  %v121 = vunpack.c.l.s4 1983009808
  %v122 = vunpack.c.0.s8 %v121
  %v123 = vlaneseq
  %v124 = vshrl.u32 %v123, 7
  %v125 = vsub.s32 %v122, %v124
  %v126 = vrot.slane %v119, %v125
  %v127 = vcombine.low %v111, %v113
  %v129 = vunpack.c.l.s4 1983009808
  %v130 = vunpack.c.0.s8 %v129
  %v131 = vlaneseq
  %v132 = vshrl.u32 %v131, 7
  %v133 = vsub.s32 %v130, %v132
  %v134 = vrot.slane %v127, %v133
  %v135 = vcombine.low %v114, %v116
  %v137 = vunpack.c.l.s4 1983009808
  %v138 = vunpack.c.0.s8 %v137
  %v139 = vlaneseq
  %v140 = vshrl.u32 %v139, 7
  %v141 = vsub.s32 %v138, %v140
  %v142 = vrot.slane %v135, %v141
  %v143 = vcombine.low %v115, %v117
  %v145 = vunpack.c.l.s4 1983009808
  %v146 = vunpack.c.0.s8 %v145
  %v147 = vlaneseq
  %v148 = vshrl.u32 %v147, 7
  %v149 = vsub.s32 %v146, %v148
  %v150 = vrot.slane %v143, %v149
  %v151 = vcombine.low %v126, %v134
  %v153 = vunpack.c.l.s4 1934713408
  %v154 = vunpack.c.0.s8 %v153
  %v155 = vlaneseq
  %v156 = vshrl.u32 %v155, 7
  %v157 = vsub.s32 %v154, %v156
  %v158 = vrot.slane %v151, %v157
  %v159 = vcombine.low %v142, %v150
  %v161 = vunpack.c.l.s4 1934713408
  %v162 = vunpack.c.0.s8 %v161
  %v163 = vlaneseq
  %v164 = vshrl.u32 %v163, 7
  %v165 = vsub.s32 %v162, %v164
  %v166 = vrot.slane %v159, %v165
  %v167 = vcombine.low %v158, %v166
  %v168 = vcombine.high %v158, %v166
  %v169 = vrot.slane %v167, 4
  %v170 = vadd.f32 %v167, %v169
  %v171 = vrot.slane %v170, 2
  %v172 = vadd.f32 %v170, %v171
  %v173 = vrot.slane %v172, 1
  %v174 = vadd.f32 %v172, %v173
  %v175 = vrot.slane %v168, 4
  %v176 = vadd.f32 %v168, %v175
  %v177 = vrot.slane %v176, 2
  %v178 = vadd.f32 %v176, %v177
  %v179 = vrot.slane %v178, 1
  %v180 = vadd.f32 %v178, %v179
  %vm183 = vcmask 1041409
  %v184 = vsel %vm183, %v180, %v174
  %v186 = vadd.f32 %v118, %v184
  %187 = vst [vmem:[#allocation2] sm:$0x3] %v186
  // Predicated region
  $region10: #{_lambda_.1} parent=0 // pred_check
    %p188 = pneg %p8
  $region11: #{_lambda_.1} parent=0 // pred_check_branch
    %190 = sbr.rel (%p188) target = $region13
  $region12: #{_lambda_.1} parent=0 // pred_region
    %v191 = vld [vmem:[#allocation2] sm:$0x3]
    %vm192 = vcmask 1041408
    %v193 = vsel %vm192, %v191, 0.0
    %194 = vadd.xlane.f32.xlu0 %v193
    %v195 = vpop.xlane.xlu0 %194
    %v196 = vrsqrt.pop %v195
    %v197 = vmul.f32 %v195, %v196
    %vm198 = vcmp.eq.f32.partialorder %v195, inf
    %v199 = vsel %vm198, %v195, %v197
    %vm200 = vcmp.eq.f32.partialorder %v195, 0.0
    %v201 = vand.u32 %v195, 2147483648
    %v202 = vsel %vm200, %v201, %v199
    %v203 = vsub.f32 %v202, 1.0
    %v204 = vmul.f32 %v203, %v203
    %s205 = smul.u32 0, 2
    %v206 = vlaneseq
    %v207 = vshrl.u32 %v206, 7
    %v208 = vstv %s205
    %v209 = vadd.s32 %v208, %v207
    %vm210 = vcmp.lt.s32.totalorder %v209, 2
    %v211 = vsel %vm210, %v204, 0.0
    %vm212 = vcmask 1024
    %v213 = vsel %vm212, %v211, 0.0
    %214 = vadd.xlane.f32.xlu0 %v213
    %v215 = vpop.xlane.xlu0 %214
    %v216 = vrot.slane %v215, 4
    %v217 = vadd.f32 %v215, %v216
    %v218 = vrot.slane %v217, 2
    %v219 = vadd.f32 %v217, %v218
    %v220 = vrot.slane %v219, 1
    %v221 = vadd.f32 %v219, %v220
    %s222 = vtos %v221
    %v223 = vstv %s222
    %224 = vst [vmem:[%s1] sm:$0xff] %v223
  $region13: #{_lambda_.1} parent=0 // pred_fallthru
    _
  // Predicated region
  $region14: #{_lambda_.1} parent=0 // pred_check
    _
  $region15: #{_lambda_.1} parent=0 // pred_check_branch
    %226 = sbr.rel (0) target = $region17
  $region16: #{_lambda_.1} parent=0 // pred_region
    _
  $region17: #{_lambda_.1} parent=0 // pred_fallthru
    _
  // Predicated region
  $region18: #{_lambda_.1} parent=0 // pred_check
    _
  $region19: #{_lambda_.1} parent=0 // pred_check_branch
    %228 = sbr.rel (0) target = $region21
  $region20: #{_lambda_.1} parent=0 // pred_region
    _
  $region21: #{_lambda_.1} parent=0 // pred_fallthru
    _

</llo_original>
